<compile_context>
chip_gen: v7x
topology: tpu7x:2x2x1
jax: 0.10.0
libtpu: 0.0.40
codegen_flags: <defaults>
</compile_context>

<pallas_src>
import functools

import numpy as np
import jax
import jax.numpy as jnp
from jax.experimental import pallas as pl
from jax.experimental.pallas import tpu as pltpu


# ----------------------------------------------------------------------------
# Fused kernel: depthwise 3x3 (dilation d, padding d) + bias
#               -> pointwise 1x1 + bias, one batch element per grid step.
# Layout inside the kernel: channels on sublanes, flattened H*W on lanes.
# ----------------------------------------------------------------------------
def _dwsep_kernel(x_ref, dwt_ref, dwb_ref, pwt_ref, pwb_ref, o_ref,
                  *, H, W, d, use_mxu):
    HW = H * W
    Cin = x_ref.shape[1]
    Cout = o_ref.shape[1]

    x = x_ref[0].astype(jnp.float32)            # (Cin, HW), spatial lane-dense
    dwt = dwt_ref[...].astype(jnp.float32)      # (Cin, 9)   per-channel taps

    # Border-validity masks (one comparison each) from a lane iota.
    pos = jax.lax.broadcasted_iota(jnp.int32, (1, HW), 1)   # flat spatial idx
    col = pos & (W - 1)                                      # x coordinate
    vy, vx = [], []
    for k in range(3):
        dd = (k - 1) * d
        if dd == 0:
            vy.append(None)
            vx.append(None)
        else:
            vy.append(((pos < HW - dd * W) if dd > 0
                       else (pos >= -dd * W)).astype(jnp.float32))
            vx.append(((col < W - dd) if dd > 0
                       else (col >= -dd)).astype(jnp.float32))

    # Depthwise 3x3 (dilation d, padding d): 9 XLU lane-rolls + masked VPU FMAs.
    acc = jnp.zeros((Cin, HW), jnp.float32)
    for ky in range(3):
        dy = (ky - 1) * d
        for kx in range(3):
            dx = (kx - 1) * d
            t = ky * 3 + kx
            tap = dwt[:, t:t + 1]                            # (Cin, 1)
            if dy == 0 and dx == 0:
                contrib = x
            else:
                off = dy * W + dx                            # flat source offset
                shifted = pltpu.roll(x, shift=(-off) % HW, axis=1)
                if vy[ky] is None:
                    m = vx[kx]
                elif vx[kx] is None:
                    m = vy[ky]
                else:
                    m = vy[ky] * vx[kx]
                contrib = shifted * m
            acc = acc + tap * contrib
    dw = acc + dwb_ref[...].astype(jnp.float32)              # (Cin, HW)

    # Pointwise 1x1.
    pwt = pwt_ref[...].astype(jnp.float32)                   # (Cout, Cin)
    pwb = pwb_ref[...].astype(jnp.float32)                   # (Cout, 1)
    if use_mxu:
        y = jnp.dot(pwt, dw, preferred_element_type=jnp.float32) + pwb
    else:
        # Cin unrolled outer-product broadcast-FMAs on the VPU.
        y = jnp.zeros((Cout, HW), jnp.float32)
        for c in range(Cin):
            y = y + pwt[:, c:c + 1] * dw[c:c + 1, :]
        y = y + pwb
    o_ref[0] = y.astype(o_ref.dtype)


def depthwise_separable_conv(x_nchw, params, dilation, *, stream_dtype=None):
    """Fused depthwise-separable conv. NCHW in / NCHW out (no layout transposes)."""
    N, Cin, H, W = x_nchw.shape
    Cout = params["pw_w"].shape[1]
    d = int(dilation)
    HW = H * W
    if W & (W - 1):
        raise NotImplementedError("W must be a power of two (lane-index trick)")

    dtype = stream_dtype if stream_dtype is not None else x_nchw.dtype
    x_flat = x_nchw.reshape(N, Cin, HW).astype(dtype)        # free reshape
    dwt = params["dw_w"].reshape(9, Cin).T.astype(dtype)     # (Cin, 9)
    dwb = params["dw_b"].reshape(Cin, 1).astype(jnp.float32)
    pwt = params["pw_w"].T.astype(dtype)                     # (Cout, Cin)
    pwb = params["pw_b"].reshape(Cout, 1).astype(jnp.float32)

    use_mxu = min(Cin, Cout) >= 64   # tiny channel counts -> VPU FMAs

    itemsize = x_flat.dtype.itemsize
    flops = N * HW * (18 * Cin + 2 * Cin * Cout)
    bytes_accessed = (N * Cin * HW * itemsize                # x
                      + N * Cout * HW * 4                    # out (f32)
                      + (9 * Cin + Cin * Cout) * itemsize    # weights
                      + (Cin + Cout) * 4)                    # biases

    kernel = functools.partial(_dwsep_kernel, H=H, W=W, d=d, use_mxu=use_mxu)
    out = pl.pallas_call(
        kernel,
        out_shape=jax.ShapeDtypeStruct((N, Cout, HW), jnp.float32),
        grid=(N,),
        in_specs=[
            pl.BlockSpec((1, Cin, HW), lambda n: (n, 0, 0)),
            pl.BlockSpec((Cin, 9), lambda n: (0, 0)),
            pl.BlockSpec((Cin, 1), lambda n: (0, 0)),
            pl.BlockSpec((Cout, Cin), lambda n: (0, 0)),
            pl.BlockSpec((Cout, 1), lambda n: (0, 0)),
        ],
        out_specs=pl.BlockSpec((1, Cout, HW), lambda n: (n, 0, 0)),
        compiler_params=pltpu.CompilerParams(
            dimension_semantics=("parallel",)),
        cost_estimate=pl.CostEstimate(flops=flops, transcendentals=0,
                                      bytes_accessed=bytes_accessed),
    )(x_flat, dwt, dwb, pwt, pwb)

    # (N, Cout, H*W) is already NCHW order: free reshape, no transpose pass.
    return out.reshape(N, Cout, H, W)


# ----------------------------------------------------------------------------
# Pure-JAX reference (correctness check only)
# ----------------------------------------------------------------------------
def _ref_forward(x_nchw, params, d):
    w_dw = params["dw_w"]                                    # (3, 3, Cin)
    Cin = w_dw.shape[-1]
    x = jnp.transpose(x_nchw, (0, 2, 3, 1))
    y = jax.lax.conv_general_dilated(
        x, w_dw.reshape(3, 3, 1, Cin), window_strides=(1, 1),
        padding=[(d, d), (d, d)], rhs_dilation=(d, d),
        dimension_numbers=("NHWC", "HWIO", "NHWC"),
        feature_group_count=Cin,
        precision=jax.lax.Precision.HIGHEST) + params["dw_b"]
    y = jnp.einsum("nhwc,cd->nhwd", y, params["pw_w"],
                   precision=jax.lax.Precision.HIGHEST) + params["pw_b"]
    return jnp.transpose(y, (0, 3, 1, 2))


# ----------------------------------------------------------------------------
if __name__ == "__main__":
    key = jax.random.PRNGKey(0)
    k1, k2, k3, k4, k5 = jax.random.split(key, 5)

    # Small shapes consistent with the module: nin=4, nout=8, dilation=2.
    N, Cin, H, W = 2, 4, 16, 16
    Cout = 8
    dilation = 2

    x = jax.random.normal(k1, (N, Cin, H, W), jnp.float32)
    params = dict(
        dw_w=0.2 * jax.random.normal(k2, (3, 3, Cin), jnp.float32),  # per-channel 3x3
        dw_b=0.1 * jax.random.normal(k3, (Cin,), jnp.float32),
        pw_w=0.2 * jax.random.normal(k4, (Cin, Cout), jnp.float32),  # (Cin, Cout)
        pw_b=0.1 * jax.random.normal(k5, (Cout,), jnp.float32),
    )

    ref = jax.block_until_ready(_ref_forward(x, params, dilation))

    # f32 streaming: strict check against the reference.
    out = jax.block_until_ready(depthwise_separable_conv(x, params, dilation))
    assert out.shape == (N, Cout, H, W)
    np.testing.assert_allclose(np.asarray(out), np.asarray(ref),
                               atol=2e-4, rtol=2e-4)

    # bf16 streaming (halves HBM bytes for activations/weights; f32 accumulate).
    out_bf16 = jax.block_until_ready(
        depthwise_separable_conv(x, params, dilation, stream_dtype=jnp.bfloat16))
    np.testing.assert_allclose(np.asarray(out_bf16), np.asarray(ref),
                               atol=5e-2, rtol=5e-2)

    print("KERNEL_OK")
</pallas_src>

<mosaic_0001>
module attributes {stable_mosaic.version = 11 : i64} {
  func.func @_dwsep_kernel(%arg0: i32, %arg1: memref<1x4x256xf32, #tpu.memory_space<vmem>>, %arg2: memref<4x9xf32, #tpu.memory_space<vmem>>, %arg3: memref<4x1xf32, #tpu.memory_space<vmem>>, %arg4: memref<8x4xf32, #tpu.memory_space<vmem>>, %arg5: memref<8x1xf32, #tpu.memory_space<vmem>>, %arg6: memref<1x8x256xf32, #tpu.memory_space<vmem>>) attributes {dimension_semantics = [#tpu.dimension_semantics<parallel>], iteration_bounds = array<i64: 2>, scalar_prefetch = 0 : i64, scratch_operands = 0 : i64, tpu.core_type = #tpu.core_type<tc>, window_params = [{transform_indices = @transform_0, window_bounds = array<i64: 1, 4, 256>}, {pipeline_mode = #tpu.pipeline_mode<synchronous>, transform_indices = @transform_1, window_bounds = array<i64: 4, 9>}, {pipeline_mode = #tpu.pipeline_mode<synchronous>, transform_indices = @transform_2, window_bounds = array<i64: 4, 1>}, {pipeline_mode = #tpu.pipeline_mode<synchronous>, transform_indices = @transform_3, window_bounds = array<i64: 8, 4>}, {pipeline_mode = #tpu.pipeline_mode<synchronous>, transform_indices = @transform_4, window_bounds = array<i64: 8, 1>}, {transform_indices = @transform_5, window_bounds = array<i64: 1, 8, 256>}]} {
    %c0 = arith.constant 0 : index
    %c0_0 = arith.constant 0 : index
    %c0_1 = arith.constant 0 : index
    %0 = vector.load %arg1[%c0, %c0_0, %c0_1] : memref<1x4x256xf32, #tpu.memory_space<vmem>>, vector<1x4x256xf32>
    %1 = vector.shape_cast %0 : vector<1x4x256xf32> to vector<4x256xf32>
    %c0_2 = arith.constant 0 : index
    %c0_3 = arith.constant 0 : index
    %2 = vector.load %arg2[%c0_2, %c0_3] : memref<4x9xf32, #tpu.memory_space<vmem>>, vector<4x9xf32>
    %3 = tpu.iota {dimensions = array<i32: 1>} : vector<1x256xi32>
    %c15_i32 = arith.constant 15 : i32
    %4 = vector.broadcast %c15_i32 : i32 to vector<1x256xi32>
    %5 = arith.andi %3, %4 : vector<1x256xi32>
    %c32_i32 = arith.constant 32 : i32
    %6 = vector.broadcast %c32_i32 : i32 to vector<1x256xi32>
    %7 = arith.cmpi sge, %3, %6 : vector<1x256xi32>
    %8 = arith.extui %7 : vector<1x256xi1> to vector<1x256xi32>
    %9 = arith.sitofp %8 : vector<1x256xi32> to vector<1x256xf32>
    %c2_i32 = arith.constant 2 : i32
    %10 = vector.broadcast %c2_i32 : i32 to vector<1x256xi32>
    %11 = arith.cmpi sge, %5, %10 : vector<1x256xi32>
    %12 = arith.extui %11 : vector<1x256xi1> to vector<1x256xi32>
    %13 = arith.sitofp %12 : vector<1x256xi32> to vector<1x256xf32>
    %c224_i32 = arith.constant 224 : i32
    %14 = vector.broadcast %c224_i32 : i32 to vector<1x256xi32>
    %15 = arith.cmpi slt, %3, %14 : vector<1x256xi32>
    %16 = arith.extui %15 : vector<1x256xi1> to vector<1x256xi32>
    %17 = arith.sitofp %16 : vector<1x256xi32> to vector<1x256xf32>
    %c14_i32 = arith.constant 14 : i32
    %18 = vector.broadcast %c14_i32 : i32 to vector<1x256xi32>
    %19 = arith.cmpi slt, %5, %18 : vector<1x256xi32>
    %20 = arith.extui %19 : vector<1x256xi1> to vector<1x256xi32>
    %21 = arith.sitofp %20 : vector<1x256xi32> to vector<1x256xf32>
    %cst = arith.constant 0.000000e+00 : f32
    %22 = vector.broadcast %cst : f32 to vector<4x256xf32>
    %23 = vector.extract_strided_slice %2 {offsets = [0, 0], sizes = [4, 1], strides = [1, 1]} : vector<4x9xf32> to vector<4x1xf32>
    %c34_i32 = arith.constant 34 : i32
    %24 = tpu.dynamic_rotate %1 by %c34_i32 dim 1 : vector<4x256xf32>, i32 -> vector<4x256xf32>
    %25 = arith.mulf %9, %13 : vector<1x256xf32>
    %26 = vector.broadcast %25 : vector<1x256xf32> to vector<4x256xf32>
    %27 = arith.mulf %24, %26 : vector<4x256xf32>
    %28 = vector.broadcast %23 : vector<4x1xf32> to vector<4x256xf32>
    %29 = arith.mulf %28, %27 : vector<4x256xf32>
    %30 = arith.addf %22, %29 : vector<4x256xf32>
    %31 = vector.extract_strided_slice %2 {offsets = [0, 1], sizes = [4, 1], strides = [1, 1]} : vector<4x9xf32> to vector<4x1xf32>
    %c32_i32_4 = arith.constant 32 : i32
    %32 = tpu.dynamic_rotate %1 by %c32_i32_4 dim 1 : vector<4x256xf32>, i32 -> vector<4x256xf32>
    %33 = vector.broadcast %9 : vector<1x256xf32> to vector<4x256xf32>
    %34 = arith.mulf %32, %33 : vector<4x256xf32>
    %35 = vector.broadcast %31 : vector<4x1xf32> to vector<4x256xf32>
    %36 = arith.mulf %35, %34 : vector<4x256xf32>
    %37 = arith.addf %30, %36 : vector<4x256xf32>
    %38 = vector.extract_strided_slice %2 {offsets = [0, 2], sizes = [4, 1], strides = [1, 1]} : vector<4x9xf32> to vector<4x1xf32>
    %c30_i32 = arith.constant 30 : i32
    %39 = tpu.dynamic_rotate %1 by %c30_i32 dim 1 : vector<4x256xf32>, i32 -> vector<4x256xf32>
    %40 = arith.mulf %9, %21 : vector<1x256xf32>
    %41 = vector.broadcast %40 : vector<1x256xf32> to vector<4x256xf32>
    %42 = arith.mulf %39, %41 : vector<4x256xf32>
    %43 = vector.broadcast %38 : vector<4x1xf32> to vector<4x256xf32>
    %44 = arith.mulf %43, %42 : vector<4x256xf32>
    %45 = arith.addf %37, %44 : vector<4x256xf32>
    %46 = vector.extract_strided_slice %2 {offsets = [0, 3], sizes = [4, 1], strides = [1, 1]} : vector<4x9xf32> to vector<4x1xf32>
    %c2_i32_5 = arith.constant 2 : i32
    %47 = tpu.dynamic_rotate %1 by %c2_i32_5 dim 1 : vector<4x256xf32>, i32 -> vector<4x256xf32>
    %48 = vector.broadcast %13 : vector<1x256xf32> to vector<4x256xf32>
    %49 = arith.mulf %47, %48 : vector<4x256xf32>
    %50 = vector.broadcast %46 : vector<4x1xf32> to vector<4x256xf32>
    %51 = arith.mulf %50, %49 : vector<4x256xf32>
    %52 = arith.addf %45, %51 : vector<4x256xf32>
    %53 = vector.extract_strided_slice %2 {offsets = [0, 4], sizes = [4, 1], strides = [1, 1]} : vector<4x9xf32> to vector<4x1xf32>
    %54 = vector.broadcast %53 : vector<4x1xf32> to vector<4x256xf32>
    %55 = arith.mulf %54, %1 : vector<4x256xf32>
    %56 = arith.addf %52, %55 : vector<4x256xf32>
    %57 = vector.extract_strided_slice %2 {offsets = [0, 5], sizes = [4, 1], strides = [1, 1]} : vector<4x9xf32> to vector<4x1xf32>
    %c254_i32 = arith.constant 254 : i32
    %58 = tpu.dynamic_rotate %1 by %c254_i32 dim 1 : vector<4x256xf32>, i32 -> vector<4x256xf32>
    %59 = vector.broadcast %21 : vector<1x256xf32> to vector<4x256xf32>
    %60 = arith.mulf %58, %59 : vector<4x256xf32>
    %61 = vector.broadcast %57 : vector<4x1xf32> to vector<4x256xf32>
    %62 = arith.mulf %61, %60 : vector<4x256xf32>
    %63 = arith.addf %56, %62 : vector<4x256xf32>
    %64 = vector.extract_strided_slice %2 {offsets = [0, 6], sizes = [4, 1], strides = [1, 1]} : vector<4x9xf32> to vector<4x1xf32>
    %c226_i32 = arith.constant 226 : i32
    %65 = tpu.dynamic_rotate %1 by %c226_i32 dim 1 : vector<4x256xf32>, i32 -> vector<4x256xf32>
    %66 = arith.mulf %17, %13 : vector<1x256xf32>
    %67 = vector.broadcast %66 : vector<1x256xf32> to vector<4x256xf32>
    %68 = arith.mulf %65, %67 : vector<4x256xf32>
    %69 = vector.broadcast %64 : vector<4x1xf32> to vector<4x256xf32>
    %70 = arith.mulf %69, %68 : vector<4x256xf32>
    %71 = arith.addf %63, %70 : vector<4x256xf32>
    %72 = vector.extract_strided_slice %2 {offsets = [0, 7], sizes = [4, 1], strides = [1, 1]} : vector<4x9xf32> to vector<4x1xf32>
    %c224_i32_6 = arith.constant 224 : i32
    %73 = tpu.dynamic_rotate %1 by %c224_i32_6 dim 1 : vector<4x256xf32>, i32 -> vector<4x256xf32>
    %74 = vector.broadcast %17 : vector<1x256xf32> to vector<4x256xf32>
    %75 = arith.mulf %73, %74 : vector<4x256xf32>
    %76 = vector.broadcast %72 : vector<4x1xf32> to vector<4x256xf32>
    %77 = arith.mulf %76, %75 : vector<4x256xf32>
    %78 = arith.addf %71, %77 : vector<4x256xf32>
    %79 = vector.extract_strided_slice %2 {offsets = [0, 8], sizes = [4, 1], strides = [1, 1]} : vector<4x9xf32> to vector<4x1xf32>
    %c222_i32 = arith.constant 222 : i32
    %80 = tpu.dynamic_rotate %1 by %c222_i32 dim 1 : vector<4x256xf32>, i32 -> vector<4x256xf32>
    %81 = arith.mulf %17, %21 : vector<1x256xf32>
    %82 = vector.broadcast %81 : vector<1x256xf32> to vector<4x256xf32>
    %83 = arith.mulf %80, %82 : vector<4x256xf32>
    %84 = vector.broadcast %79 : vector<4x1xf32> to vector<4x256xf32>
    %85 = arith.mulf %84, %83 : vector<4x256xf32>
    %86 = arith.addf %78, %85 : vector<4x256xf32>
    %c0_7 = arith.constant 0 : index
    %c0_8 = arith.constant 0 : index
    %87 = vector.load %arg3[%c0_7, %c0_8] : memref<4x1xf32, #tpu.memory_space<vmem>>, vector<4x1xf32>
    %88 = vector.broadcast %87 : vector<4x1xf32> to vector<4x256xf32>
    %89 = arith.addf %86, %88 : vector<4x256xf32>
    %c0_9 = arith.constant 0 : index
    %c0_10 = arith.constant 0 : index
    %90 = vector.load %arg4[%c0_9, %c0_10] : memref<8x4xf32, #tpu.memory_space<vmem>>, vector<8x4xf32>
    %c0_11 = arith.constant 0 : index
    %c0_12 = arith.constant 0 : index
    %91 = vector.load %arg5[%c0_11, %c0_12] : memref<8x1xf32, #tpu.memory_space<vmem>>, vector<8x1xf32>
    %cst_13 = arith.constant 0.000000e+00 : f32
    %92 = vector.broadcast %cst_13 : f32 to vector<8x256xf32>
    %93 = vector.extract_strided_slice %90 {offsets = [0, 0], sizes = [8, 1], strides = [1, 1]} : vector<8x4xf32> to vector<8x1xf32>
    %94 = vector.extract_strided_slice %89 {offsets = [0, 0], sizes = [1, 256], strides = [1, 1]} : vector<4x256xf32> to vector<1x256xf32>
    %95 = vector.broadcast %93 : vector<8x1xf32> to vector<8x256xf32>
    %96 = vector.broadcast %94 : vector<1x256xf32> to vector<8x256xf32>
    %97 = arith.mulf %95, %96 : vector<8x256xf32>
    %98 = arith.addf %92, %97 : vector<8x256xf32>
    %99 = vector.extract_strided_slice %90 {offsets = [0, 1], sizes = [8, 1], strides = [1, 1]} : vector<8x4xf32> to vector<8x1xf32>
    %100 = vector.extract_strided_slice %89 {offsets = [1, 0], sizes = [1, 256], strides = [1, 1]} : vector<4x256xf32> to vector<1x256xf32>
    %101 = vector.broadcast %99 : vector<8x1xf32> to vector<8x256xf32>
    %102 = vector.broadcast %100 : vector<1x256xf32> to vector<8x256xf32>
    %103 = arith.mulf %101, %102 : vector<8x256xf32>
    %104 = arith.addf %98, %103 : vector<8x256xf32>
    %105 = vector.extract_strided_slice %90 {offsets = [0, 2], sizes = [8, 1], strides = [1, 1]} : vector<8x4xf32> to vector<8x1xf32>
    %106 = vector.extract_strided_slice %89 {offsets = [2, 0], sizes = [1, 256], strides = [1, 1]} : vector<4x256xf32> to vector<1x256xf32>
    %107 = vector.broadcast %105 : vector<8x1xf32> to vector<8x256xf32>
    %108 = vector.broadcast %106 : vector<1x256xf32> to vector<8x256xf32>
    %109 = arith.mulf %107, %108 : vector<8x256xf32>
    %110 = arith.addf %104, %109 : vector<8x256xf32>
    %111 = vector.extract_strided_slice %90 {offsets = [0, 3], sizes = [8, 1], strides = [1, 1]} : vector<8x4xf32> to vector<8x1xf32>
    %112 = vector.extract_strided_slice %89 {offsets = [3, 0], sizes = [1, 256], strides = [1, 1]} : vector<4x256xf32> to vector<1x256xf32>
    %113 = vector.broadcast %111 : vector<8x1xf32> to vector<8x256xf32>
    %114 = vector.broadcast %112 : vector<1x256xf32> to vector<8x256xf32>
    %115 = arith.mulf %113, %114 : vector<8x256xf32>
    %116 = arith.addf %110, %115 : vector<8x256xf32>
    %117 = vector.broadcast %91 : vector<8x1xf32> to vector<8x256xf32>
    %118 = arith.addf %116, %117 : vector<8x256xf32>
    %c0_14 = arith.constant 0 : index
    %c0_15 = arith.constant 0 : index
    %c0_16 = arith.constant 0 : index
    %119 = vector.load %arg6[%c0_14, %c0_15, %c0_16] : memref<1x8x256xf32, #tpu.memory_space<vmem>>, vector<1x8x256xf32>
    %120 = vector.shape_cast %119 : vector<1x8x256xf32> to vector<8x256xf32>
    %121 = vector.shape_cast %118 : vector<8x256xf32> to vector<1x8x256xf32>
    tpu.vector_store %arg6[%c0_14, %c0_15, %c0_16], %121 {strides = array<i32>} : memref<1x8x256xf32, #tpu.memory_space<vmem>>, vector<1x8x256xf32>,
    return
  }
  func.func @transform_0(%arg0: i32) -> (i32, i32, i32) {
    %c0_i32 = arith.constant 0 : i32
    %c0_i32_0 = arith.constant 0 : i32
    %c0_i32_1 = arith.constant 0 : i32
    return %arg0, %c0_i32, %c0_i32_0 : i32, i32, i32
  }
  func.func @transform_1(%arg0: i32) -> (i32, i32) {
    %c0_i32 = arith.constant 0 : i32
    %c0_i32_0 = arith.constant 0 : i32
    %c0_i32_1 = arith.constant 0 : i32
    return %c0_i32, %c0_i32_0 : i32, i32
  }
  func.func @transform_2(%arg0: i32) -> (i32, i32) {
    %c0_i32 = arith.constant 0 : i32
    %c0_i32_0 = arith.constant 0 : i32
    %c0_i32_1 = arith.constant 0 : i32
    return %c0_i32, %c0_i32_0 : i32, i32
  }
  func.func @transform_3(%arg0: i32) -> (i32, i32) {
    %c0_i32 = arith.constant 0 : i32
    %c0_i32_0 = arith.constant 0 : i32
    %c0_i32_1 = arith.constant 0 : i32
    return %c0_i32, %c0_i32_0 : i32, i32
  }
  func.func @transform_4(%arg0: i32) -> (i32, i32) {
    %c0_i32 = arith.constant 0 : i32
    %c0_i32_0 = arith.constant 0 : i32
    %c0_i32_1 = arith.constant 0 : i32
    return %c0_i32, %c0_i32_0 : i32, i32
  }
  func.func @transform_5(%arg0: i32) -> (i32, i32, i32) {
    %c0_i32 = arith.constant 0 : i32
    %c0_i32_0 = arith.constant 0 : i32
    %c0_i32_1 = arith.constant 0 : i32
    return %arg0, %c0_i32, %c0_i32_0 : i32, i32, i32
  }
}

</mosaic_0001>

<llo_original>
// kernel: tpu_custom_call.1
$region0: #{tpu_custom_call.1}
  #allocation0 [shape = 'u32[]', space=smem, size = 0x4, offset = 0x4, fixed_abs, tag = 'smem constant byte address 0x4 - core index']
  #allocation1 [shape = 'u32[144,128]{1,0:T(1,128)}', space=vmem, size = 0x12000, scoped, tag = 'internal scratch']
  %s0 = inlined_call_operand.vmem [shape: f32[2,4,256], index: 0, kind: input, shape index: {}]
  %s1 = inlined_call_operand.vmem [shape: f32[4,9], index: 1, kind: input, shape index: {}]
  %s2 = inlined_call_operand.vmem [shape: f32[4,1], index: 2, kind: input, shape index: {}]
  %s3 = inlined_call_operand.vmem [shape: f32[8,4], index: 3, kind: input, shape index: {}]
  %s4 = inlined_call_operand.vmem [shape: f32[8,1], index: 4, kind: input, shape index: {}]
  %s5 = inlined_call_operand.hbm [shape: f32[2,8,256], index: 5, kind: output, shape index: {}]
  %s6 = sld [smem:[#allocation0]]
  $region53: #{tpu_custom_call.1} parent=0
    _
  %s8 = ssub.s32 1, %s6
  %s9 = scalar_select 0, %s8, %s6
  $region1: #{tpu_custom_call.1} parent=0
    #allocation2 [shape = 'u8[16384]{0}', space=vmem, size = 0x4000, scoped, tag = 'output window, operand 0']
    #allocation3 [shape = 's32[2]{0}', space=sflag, size = 0x8, scoped, tag = 'scoped memory for tpu_custom_call.1']
    %10 = vsyncpa [#allocation3], 0
    %s11 = scalar_lea.sflag [#allocation3], 1
    %12 = vsyncpa %s11, 0
    loop: start=0, step=1, limit=4
    $region2: #{tpu_custom_call.1} parent=1 // loop_pre_header
      _
    $region3: #{tpu_custom_call.1} parent=1 // loop_header
      %s14 = sphi 0, %s18
      %p15 = scmp.ge.s32.totalorder %s14, 4
      %s24 = sphi 0, %s26
      %s27 = sphi 0, %s24
      %s28 = sphi 0, %s27
      %s44 = sphi 0, %s28
      %s48 = sphi 0, %s48
      %s50 = sphi 0, %s48
      %s51 = sphi 0, %s50
      %s65 = sphi 0, %s51
      %s69 = sphi 0, %s69
      %s71 = sphi 0, %s69
      %s72 = sphi 0, %s71
      %s86 = sphi 0, %s72
      %s90 = sphi 0, %s90
      %s92 = sphi 0, %s90
      %s93 = sphi 0, %s92
      %s107 = sphi 0, %s93
      %s111 = sphi 0, %s111
      %s113 = sphi 0, %s111
      %s114 = sphi 0, %s113
      %s128 = sphi 0, %s114
      %s134 = sphi 0, %s136
      %s137 = sphi 0, %s134
      %s138 = sphi 0, %s137
      %s154 = sphi 0, %s138
    $region4: #{tpu_custom_call.1} parent=1 // loop_header_branch
      %17 = sbr.rel (%p15) target = $region8
    $region5: #{tpu_custom_call.1} parent=1 // loop_body
      %s19 = ssub.s32 %s14, 1
      %s20 = ssub.s32 %s14, 2
      %s21 = sadd.s32 %s14, 1
      %s22 = ssub.s32 %s14, %s21
      %p23 = scmp.eq.s32.totalorder %s22, 0
      %s25 = sadd.s32 %s24, 1
      %s26 = scalar_select %p23, %s24, %s25
      %p29 = pneg %p23
      %p30 = scmp.eq.s32.totalorder %s14, 1
      %p31 = por %p29, %p30
      %p32 = scmp.ne.s32.totalorder %s24, %s27
      %p33 = scmp.eq.s32.totalorder %s14, 0
      %p34 = por %p32, %p33
      %p35 = scmp.ne.s32.totalorder %s24, %s27
      %p36 = scmp.eq.s32.totalorder %s19, 1
      %p37 = por %p35, %p36
      %p38 = scmp.ne.s32.totalorder %s27, %s28
      %p39 = scmp.eq.s32.totalorder %s19, 0
      %p40 = por %p38, %p39
      %p41 = scmp.ne.s32.totalorder %s27, %s28
      %p42 = scmp.eq.s32.totalorder %s20, 1
      %p43 = por %p41, %p42
      %p45 = scmp.ne.s32.totalorder %s28, %s44
      %p46 = scmp.eq.s32.totalorder %s20, 0
      %p47 = por %p45, %p46
      %s49 = sadd.s32 %s48, 1
      %p52 = scmp.eq.s32.totalorder %s14, 1
      %p53 = scmp.ne.s32.totalorder %s48, %s50
      %p54 = scmp.eq.s32.totalorder %s14, 0
      %p55 = por %p53, %p54
      %p56 = scmp.ne.s32.totalorder %s48, %s50
      %p57 = scmp.eq.s32.totalorder %s19, 1
      %p58 = por %p56, %p57
      %p59 = scmp.ne.s32.totalorder %s50, %s51
      %p60 = scmp.eq.s32.totalorder %s19, 0
      %p61 = por %p59, %p60
      %p62 = scmp.ne.s32.totalorder %s50, %s51
      %p63 = scmp.eq.s32.totalorder %s20, 1
      %p64 = por %p62, %p63
      %p66 = scmp.ne.s32.totalorder %s51, %s65
      %p67 = scmp.eq.s32.totalorder %s20, 0
      %p68 = por %p66, %p67
      %s70 = sadd.s32 %s69, 1
      %p73 = scmp.eq.s32.totalorder %s14, 1
      %p74 = scmp.ne.s32.totalorder %s69, %s71
      %p75 = scmp.eq.s32.totalorder %s14, 0
      %p76 = por %p74, %p75
      %p77 = scmp.ne.s32.totalorder %s69, %s71
      %p78 = scmp.eq.s32.totalorder %s19, 1
      %p79 = por %p77, %p78
      %p80 = scmp.ne.s32.totalorder %s71, %s72
      %p81 = scmp.eq.s32.totalorder %s19, 0
      %p82 = por %p80, %p81
      %p83 = scmp.ne.s32.totalorder %s71, %s72
      %p84 = scmp.eq.s32.totalorder %s20, 1
      %p85 = por %p83, %p84
      %p87 = scmp.ne.s32.totalorder %s72, %s86
      %p88 = scmp.eq.s32.totalorder %s20, 0
      %p89 = por %p87, %p88
      %s91 = sadd.s32 %s90, 1
      %p94 = scmp.eq.s32.totalorder %s14, 1
      %p95 = scmp.ne.s32.totalorder %s90, %s92
      %p96 = scmp.eq.s32.totalorder %s14, 0
      %p97 = por %p95, %p96
      %p98 = scmp.ne.s32.totalorder %s90, %s92
      %p99 = scmp.eq.s32.totalorder %s19, 1
      %p100 = por %p98, %p99
      %p101 = scmp.ne.s32.totalorder %s92, %s93
      %p102 = scmp.eq.s32.totalorder %s19, 0
      %p103 = por %p101, %p102
      %p104 = scmp.ne.s32.totalorder %s92, %s93
      %p105 = scmp.eq.s32.totalorder %s20, 1
      %p106 = por %p104, %p105
      %p108 = scmp.ne.s32.totalorder %s93, %s107
      %p109 = scmp.eq.s32.totalorder %s20, 0
      %p110 = por %p108, %p109
      %s112 = sadd.s32 %s111, 1
      %p115 = scmp.eq.s32.totalorder %s14, 1
      %p116 = scmp.ne.s32.totalorder %s111, %s113
      %p117 = scmp.eq.s32.totalorder %s14, 0
      %p118 = por %p116, %p117
      %p119 = scmp.ne.s32.totalorder %s111, %s113
      %p120 = scmp.eq.s32.totalorder %s19, 1
      %p121 = por %p119, %p120
      %p122 = scmp.ne.s32.totalorder %s113, %s114
      %p123 = scmp.eq.s32.totalorder %s19, 0
      %p124 = por %p122, %p123
      %p125 = scmp.ne.s32.totalorder %s113, %s114
      %p126 = scmp.eq.s32.totalorder %s20, 1
      %p127 = por %p125, %p126
      %p129 = scmp.ne.s32.totalorder %s114, %s128
      %p130 = scmp.eq.s32.totalorder %s20, 0
      %p131 = por %p129, %p130
      %s132 = ssub.s32 %s14, %s21
      %p133 = scmp.eq.s32.totalorder %s132, 0
      %s135 = sadd.s32 %s134, 1
      %s136 = scalar_select %p133, %s134, %s135
      %p139 = pneg %p133
      %p140 = scmp.eq.s32.totalorder %s14, 1
      %p141 = por %p139, %p140
      %p142 = scmp.ne.s32.totalorder %s134, %s137
      %p143 = scmp.eq.s32.totalorder %s14, 0
      %p144 = por %p142, %p143
      %p145 = scmp.ne.s32.totalorder %s134, %s137
      %p146 = scmp.eq.s32.totalorder %s19, 1
      %p147 = por %p145, %p146
      %p148 = scmp.ne.s32.totalorder %s137, %s138
      %p149 = scmp.eq.s32.totalorder %s19, 0
      %p150 = por %p148, %p149
      %p151 = scmp.ne.s32.totalorder %s137, %s138
      %p152 = scmp.eq.s32.totalorder %s20, 1
      %p153 = por %p151, %p152
      %p155 = scmp.ne.s32.totalorder %s138, %s154
      %p156 = scmp.eq.s32.totalorder %s20, 0
      %p157 = por %p155, %p156
      %p158 = scmp.le.s32.totalorder 1, %s14
      %p159 = scmp.lt.s32.totalorder %s14, 3
      %p160 = pnand %p158, %p159
      %p161 = pneg %p160
      // Predicated region
      $region9: #{tpu_custom_call.1} parent=5 // pred_check
        _
      $region10: #{tpu_custom_call.1} parent=5 // pred_check_branch
        %163 = sbr.rel (%p160) target = $region12
      $region11: #{tpu_custom_call.1} parent=5 // pred_region
        %s164 = ssub.s32 %s14, 1
        // Predicated region
        $region13: #{tpu_custom_call.1} parent=11 // pred_check
          %p165 = pneg %p61
        $region14: #{tpu_custom_call.1} parent=11 // pred_check_branch
          %167 = sbr.rel (%p165) target = $region16
        $region15: #{tpu_custom_call.1} parent=11 // pred_region
          _
        $region16: #{tpu_custom_call.1} parent=11 // pred_fallthru
          _
        // Predicated region
        $region17: #{tpu_custom_call.1} parent=11 // pred_check
          %p168 = pneg %p82
        $region18: #{tpu_custom_call.1} parent=11 // pred_check_branch
          %170 = sbr.rel (%p168) target = $region20
        $region19: #{tpu_custom_call.1} parent=11 // pred_region
          _
        $region20: #{tpu_custom_call.1} parent=11 // pred_fallthru
          _
        // Predicated region
        $region21: #{tpu_custom_call.1} parent=11 // pred_check
          %p171 = pneg %p103
        $region22: #{tpu_custom_call.1} parent=11 // pred_check_branch
          %173 = sbr.rel (%p171) target = $region24
        $region23: #{tpu_custom_call.1} parent=11 // pred_region
          _
        $region24: #{tpu_custom_call.1} parent=11 // pred_fallthru
          _
        // Predicated region
        $region25: #{tpu_custom_call.1} parent=11 // pred_check
          %p174 = pneg %p124
        $region26: #{tpu_custom_call.1} parent=11 // pred_check_branch
          %176 = sbr.rel (%p174) target = $region28
        $region27: #{tpu_custom_call.1} parent=11 // pred_region
          _
        $region28: #{tpu_custom_call.1} parent=11 // pred_fallthru
          _
      $region12: #{tpu_custom_call.1} parent=5 // pred_fallthru
        _
      %p177 = scmp.lt.s32.totalorder %s14, 2
      // Predicated region
      $region29: #{tpu_custom_call.1} parent=5 // pred_check
        %p178 = pneg %p177
      $region30: #{tpu_custom_call.1} parent=5 // pred_check_branch
        %180 = sbr.rel (%p178) target = $region32
      $region31: #{tpu_custom_call.1} parent=5 // pred_region
        // Predicated region
        $region33: #{tpu_custom_call.1} parent=31 // pred_check
          %p181 = pneg %p34
        $region34: #{tpu_custom_call.1} parent=31 // pred_check_branch
          %183 = sbr.rel (%p181) target = $region36
        $region35: #{tpu_custom_call.1} parent=31 // pred_region
          %p184 = scmp.lt.s32.totalorder %s14, 1
          %s185 = scalar_select %p184, %s14, 1
          %s186 = smul.addr %s185, 2
          %s187 = smul.addr %s186, 4
          %s188 = scalar_lea.vmem %s0, %s187
        $region36: #{tpu_custom_call.1} parent=31 // pred_fallthru
          _
      $region32: #{tpu_custom_call.1} parent=5 // pred_fallthru
        _
      %p189 = scmp.le.s32.totalorder 1, %s14
      %p190 = scmp.lt.s32.totalorder %s14, 3
      %p191 = pnand %p189, %p190
      %p192 = pneg %p191
      // Predicated region
      $region37: #{tpu_custom_call.1} parent=5 // pred_check
        _
      $region38: #{tpu_custom_call.1} parent=5 // pred_check_branch
        %194 = sbr.rel (%p191) target = $region40
      $region39: #{tpu_custom_call.1} parent=5 // pred_region
        %s195 = ssub.s32 %s14, 1
        %p196 = scmp.lt.s32.totalorder %s19, 1
        %s197 = scalar_select %p196, %s19, 1
        %s198 = smul.addr %s197, 2
        %s199 = smul.addr %s198, 4
        %s200 = scalar_lea.vmem %s0, %s199
        %p201 = pneg %p40
        %p202 = pneg %p37
        %p203 = pneg %p61
        %p204 = pneg %p58
        %p205 = pneg %p82
        %p206 = pneg %p79
        %p207 = pneg %p103
        %p208 = pneg %p100
        %p209 = pneg %p124
        %p210 = pneg %p121
        %p211 = pneg %p150
        %p212 = pneg %p147
        %s213 = sand.u32 %s137, 1
        %s214 = scalar_lea.sflag [#allocation3], %s213
        %s215 = sand.u32 %s137, 1
        %s216 = smul.addr %s215, 16
        %s217 = scalar_lea.vmem [#allocation2], %s216
        %p218 = scmp.lt.s32.totalorder %s19, 1
        %s219 = scalar_select %p218, %s19, 1
        %s220 = smul.addr %s219, 2
        %s221 = smul.addr %s220, 4
        %s222 = scalar_lea.vmem %s0, %s221
        %v223 = vld [vmem:[%s222] sm:$0xff]
        %v224 = vld [vmem:[%s1] sm:$0xf]
        %v225 = vlaneseq
        %v226 = vand.u32 %v225, 127
        %v227 = vadd.s32 %v226, 128
        %v228 = vand.u32 %v226, 15
        %v229 = vand.u32 %v227, 15
        %vm230 = vcmp.ge.s32.totalorder %v226, 32
        %vm231 = vcmp.ge.s32.totalorder %v227, 32
        %v232 = vsel %vm230, 1, 0
        %v233 = vsel %vm231, 1, 0
        %v234 = vcvt.s32.f32 %v232
        %v235 = vcvt.s32.f32 %v233
        %vm236 = vcmp.ge.s32.totalorder %v228, 2
        %vm237 = vcmp.ge.s32.totalorder %v229, 2
        %v238 = vsel %vm236, 1, 0
        %v239 = vsel %vm237, 1, 0
        %v240 = vcvt.s32.f32 %v238
        %v241 = vcvt.s32.f32 %v239
        %vm242 = vcmp.lt.s32.totalorder %v226, 224
        %vm243 = vcmp.lt.s32.totalorder %v227, 224
        %v244 = vsel %vm242, 1, 0
        %v245 = vsel %vm243, 1, 0
        %v246 = vcvt.s32.f32 %v244
        %v247 = vcvt.s32.f32 %v245
        %vm248 = vcmp.lt.s32.totalorder %v228, 14
        %vm249 = vcmp.lt.s32.totalorder %v229, 14
        %v250 = vsel %vm248, 1, 0
        %v251 = vsel %vm249, 1, 0
        %v252 = vcvt.s32.f32 %v250
        %v253 = vcvt.s32.f32 %v251
        %v255 = vcombine.high %v223, %v223
        %257 = vrot.lane.b32.xlu0 %v223, 34
        %v258 = vpop.permute.xlu0 %257
        %259 = vrot.lane.b32.xlu0 %v255, 34
        %v260 = vpop.permute.xlu0 %259
        %vm261 = vcmp.lt.s32.totalorder %v226, 34
        %v262 = vsel %vm261, %v258, %v260
        %v263 = vsel %vm261, %v260, %v258
        %v264 = vmul.f32 %v234, %v240
        %v265 = vmul.f32 %v235, %v241
        %v266 = vmul.f32 %v263, %v264
        %v267 = vmul.f32 %v262, %v265
        %269 = vset.pattern.permute.xlu0 0
        %270 = vperm.xlu0 %269, %v224
        %v271 = vpop.permute.xlu0 %270
        %v273 = vmul.f32 %v271, %v266
        %v274 = vmul.f32 %v271, %v267
        %v275 = vadd.f32 %v273, 0.0
        %v276 = vadd.f32 %v274, 0.0
        %277 = vrot.lane.b32.xlu0 %v223, 32
        %v278 = vpop.permute.xlu0 %277
        %279 = vrot.lane.b32.xlu0 %v255, 32
        %v280 = vpop.permute.xlu0 %279
        %vm281 = vcmp.lt.s32.totalorder %v226, 32
        %v282 = vsel %vm281, %v278, %v280
        %v283 = vsel %vm281, %v280, %v278
        %v284 = vmul.f32 %v283, %v234
        %v285 = vmul.f32 %v282, %v235
        %286 = vset.pattern.permute.xlu0 1
        %287 = vperm.xlu0 %286, %v224
        %v288 = vpop.permute.xlu0 %287
        %v290 = vmul.f32 %v288, %v284
        %v291 = vmul.f32 %v288, %v285
        %v292 = vadd.f32 %v275, %v290
        %v293 = vadd.f32 %v276, %v291
        %294 = vrot.lane.b32.xlu0 %v223, 30
        %v295 = vpop.permute.xlu0 %294
        %296 = vrot.lane.b32.xlu0 %v255, 30
        %v297 = vpop.permute.xlu0 %296
        %vm298 = vcmp.lt.s32.totalorder %v226, 30
        %v299 = vsel %vm298, %v295, %v297
        %v300 = vsel %vm298, %v297, %v295
        %v301 = vmul.f32 %v234, %v252
        %v302 = vmul.f32 %v235, %v253
        %v303 = vmul.f32 %v300, %v301
        %v304 = vmul.f32 %v299, %v302
        %305 = vset.pattern.permute.xlu0 2
        %306 = vperm.xlu0 %305, %v224
        %v307 = vpop.permute.xlu0 %306
        %v309 = vmul.f32 %v307, %v303
        %v310 = vmul.f32 %v307, %v304
        %v311 = vadd.f32 %v292, %v309
        %v312 = vadd.f32 %v293, %v310
        %313 = vrot.lane.b32.xlu0 %v223, 2
        %v314 = vpop.permute.xlu0 %313
        %315 = vrot.lane.b32.xlu0 %v255, 2
        %v316 = vpop.permute.xlu0 %315
        %vm317 = vcmp.lt.s32.totalorder %v226, 2
        %v318 = vsel %vm317, %v314, %v316
        %v319 = vsel %vm317, %v316, %v314
        %v320 = vmul.f32 %v319, %v240
        %v321 = vmul.f32 %v318, %v241
        %322 = vset.pattern.permute.xlu0 3
        %323 = vperm.xlu0 %322, %v224
        %v324 = vpop.permute.xlu0 %323
        %v326 = vmul.f32 %v324, %v320
        %v327 = vmul.f32 %v324, %v321
        %v328 = vadd.f32 %v311, %v326
        %v329 = vadd.f32 %v312, %v327
        %330 = vset.pattern.permute.xlu0 4
        %331 = vperm.xlu0 %330, %v224
        %v332 = vpop.permute.xlu0 %331
        %v334 = vmul.f32 %v332, %v223
        %v335 = vmul.f32 %v332, %v255
        %v336 = vadd.f32 %v328, %v334
        %v337 = vadd.f32 %v329, %v335
        %338 = vrot.lane.b32.xlu0 %v223, 126
        %v339 = vpop.permute.xlu0 %338
        %340 = vrot.lane.b32.xlu0 %v255, 126
        %v341 = vpop.permute.xlu0 %340
        %vm342 = vcmp.lt.s32.totalorder %v226, 126
        %v343 = vsel %vm342, %v339, %v341
        %v344 = vsel %vm342, %v341, %v339
        %v345 = vmul.f32 %v343, %v252
        %v346 = vmul.f32 %v344, %v253
        %347 = vset.pattern.permute.xlu0 5
        %348 = vperm.xlu0 %347, %v224
        %v349 = vpop.permute.xlu0 %348
        %v351 = vmul.f32 %v349, %v345
        %v352 = vmul.f32 %v349, %v346
        %v353 = vadd.f32 %v336, %v351
        %v354 = vadd.f32 %v337, %v352
        %355 = vrot.lane.b32.xlu0 %v223, 98
        %v356 = vpop.permute.xlu0 %355
        %357 = vrot.lane.b32.xlu0 %v255, 98
        %v358 = vpop.permute.xlu0 %357
        %vm359 = vcmp.lt.s32.totalorder %v226, 98
        %v360 = vsel %vm359, %v356, %v358
        %v361 = vsel %vm359, %v358, %v356
        %v362 = vmul.f32 %v246, %v240
        %v363 = vmul.f32 %v247, %v241
        %v364 = vmul.f32 %v360, %v362
        %v365 = vmul.f32 %v361, %v363
        %366 = vset.pattern.permute.xlu0 6
        %367 = vperm.xlu0 %366, %v224
        %v368 = vpop.permute.xlu0 %367
        %v370 = vmul.f32 %v368, %v364
        %v371 = vmul.f32 %v368, %v365
        %v372 = vadd.f32 %v353, %v370
        %v373 = vadd.f32 %v354, %v371
        %374 = vrot.lane.b32.xlu0 %v223, 96
        %v375 = vpop.permute.xlu0 %374
        %376 = vrot.lane.b32.xlu0 %v255, 96
        %v377 = vpop.permute.xlu0 %376
        %vm378 = vcmp.lt.s32.totalorder %v226, 96
        %v379 = vsel %vm378, %v375, %v377
        %v380 = vsel %vm378, %v377, %v375
        %v381 = vmul.f32 %v379, %v246
        %v382 = vmul.f32 %v380, %v247
        %383 = vset.pattern.permute.xlu0 7
        %384 = vperm.xlu0 %383, %v224
        %v385 = vpop.permute.xlu0 %384
        %v387 = vmul.f32 %v385, %v381
        %v388 = vmul.f32 %v385, %v382
        %v389 = vadd.f32 %v372, %v387
        %v390 = vadd.f32 %v373, %v388
        %391 = vrot.lane.b32.xlu0 %v223, 94
        %v392 = vpop.permute.xlu0 %391
        %393 = vrot.lane.b32.xlu0 %v255, 94
        %v394 = vpop.permute.xlu0 %393
        %vm395 = vcmp.lt.s32.totalorder %v226, 94
        %v396 = vsel %vm395, %v392, %v394
        %v397 = vsel %vm395, %v394, %v392
        %v398 = vmul.f32 %v246, %v252
        %v399 = vmul.f32 %v247, %v253
        %v400 = vmul.f32 %v396, %v398
        %v401 = vmul.f32 %v397, %v399
        %402 = vset.pattern.permute.xlu0 8
        %403 = vperm.xlu0 %402, %v224
        %v404 = vpop.permute.xlu0 %403
        %v406 = vmul.f32 %v404, %v400
        %v407 = vmul.f32 %v404, %v401
        %v408 = vadd.f32 %v389, %v406
        %v409 = vadd.f32 %v390, %v407
        %v410 = vld [vmem:[%s2] sm:$0xf]
        %412 = vset.pattern.permute.xlu0 0
        %413 = vperm.xlu0 %412, %v410
        %v414 = vpop.permute.xlu0 %413
        %v416 = vadd.f32 %v408, %v414
        %v417 = vadd.f32 %v409, %v414
        %v418 = vld [vmem:[%s3] sm:$0xff]
        %v419 = vld [vmem:[%s4] sm:$0xff]
        %421 = vset.pattern.permute.xlu0 0
        %422 = vperm.xlu0 %421, %v418
        %v423 = vpop.permute.xlu0 %422
        %v425 = vlaneseq
        %v426 = vshrl.u32 %v425, 7
        %v427 = vsub.s32 0, %v426
        %v428 = vrot.slane %v416, %v427
        %v429 = vlaneseq
        %v430 = vshrl.u32 %v429, 7
        %v431 = vsub.s32 0, %v430
        %v432 = vrot.slane %v417, %v431
        %v433 = vmul.f32 %v423, %v428
        %v434 = vmul.f32 %v423, %v432
        %v435 = vadd.f32 %v433, 0.0
        %v436 = vadd.f32 %v434, 0.0
        %437 = vset.pattern.permute.xlu0 1
        %438 = vperm.xlu0 %437, %v418
        %v439 = vpop.permute.xlu0 %438
        %v441 = vlaneseq
        %v442 = vshrl.u32 %v441, 7
        %v443 = vsub.s32 1, %v442
        %v444 = vrot.slane %v416, %v443
        %v445 = vlaneseq
        %v446 = vshrl.u32 %v445, 7
        %v447 = vsub.s32 1, %v446
        %v448 = vrot.slane %v417, %v447
        %v449 = vmul.f32 %v439, %v444
        %v450 = vmul.f32 %v439, %v448
        %v451 = vadd.f32 %v435, %v449
        %v452 = vadd.f32 %v436, %v450
        %453 = vset.pattern.permute.xlu0 2
        %454 = vperm.xlu0 %453, %v418
        %v455 = vpop.permute.xlu0 %454
        %v457 = vlaneseq
        %v458 = vshrl.u32 %v457, 7
        %v459 = vsub.s32 2, %v458
        %v460 = vrot.slane %v416, %v459
        %v461 = vlaneseq
        %v462 = vshrl.u32 %v461, 7
        %v463 = vsub.s32 2, %v462
        %v464 = vrot.slane %v417, %v463
        %v465 = vmul.f32 %v455, %v460
        %v466 = vmul.f32 %v455, %v464
        %v467 = vadd.f32 %v451, %v465
        %v468 = vadd.f32 %v452, %v466
        %469 = vset.pattern.permute.xlu0 3
        %470 = vperm.xlu0 %469, %v418
        %v471 = vpop.permute.xlu0 %470
        %v473 = vlaneseq
        %v474 = vshrl.u32 %v473, 7
        %v475 = vsub.s32 3, %v474
        %v476 = vrot.slane %v416, %v475
        %v477 = vlaneseq
        %v478 = vshrl.u32 %v477, 7
        %v479 = vsub.s32 3, %v478
        %v480 = vrot.slane %v417, %v479
        %v481 = vmul.f32 %v471, %v476
        %v482 = vmul.f32 %v471, %v480
        %v483 = vadd.f32 %v467, %v481
        %v484 = vadd.f32 %v468, %v482
        %486 = vset.pattern.permute.xlu0 0
        %487 = vperm.xlu0 %486, %v419
        %v488 = vpop.permute.xlu0 %487
        %v490 = vadd.f32 %v483, %v488
        %v491 = vadd.f32 %v484, %v488
        %492 = vst [vmem:[%s217] sm:$0xff] %v490
        %493 = vst [vmem:[%s217 + $0x8] sm:$0xff] %v491
        %s494 = sand.u32 %s137, 1
        %s495 = scalar_lea.sflag [#allocation3], %s494
        %s496 = sand.u32 %s137, 1
        %s497 = smul.addr %s496, 16
        %s498 = scalar_lea.vmem [#allocation2], %s497
        // Predicated region
        $region41: #{tpu_custom_call.1} parent=39 // pred_check
          %p499 = pneg %p147
        $region42: #{tpu_custom_call.1} parent=39 // pred_check_branch
          %501 = sbr.rel (%p499) target = $region44
        $region43: #{tpu_custom_call.1} parent=39 // pred_region
          %s503 = ssub.s32 256, 256
          %504 = vsyncadd %s495, %s503
          %s505 = smul.addr %s19, 2
          %s506 = smul.addr %s505, 128
          %s507 = scalar_lea.hbm %s5, %s506
          %s509 = sshll.u32 %s498, 4
          %s510 = int_to_ptr.vmem [resolvable:$true] %s509
          %512 = dma.vmem_to_hbm [thread:$0]  %s510, 256, %s507, %s495
        $region44: #{tpu_custom_call.1} parent=39 // pred_fallthru
          _
      $region40: #{tpu_custom_call.1} parent=5 // pred_fallthru
        _
      %p513 = scmp.le.s32.totalorder 2, %s14
      // Predicated region
      $region45: #{tpu_custom_call.1} parent=5 // pred_check
        %p514 = pneg %p513
      $region46: #{tpu_custom_call.1} parent=5 // pred_check_branch
        %516 = sbr.rel (%p514) target = $region48
      $region47: #{tpu_custom_call.1} parent=5 // pred_region
        %s517 = ssub.s32 %s14, 2
        // Predicated region
        $region49: #{tpu_custom_call.1} parent=47 // pred_check
          %p518 = pneg %p153
        $region50: #{tpu_custom_call.1} parent=47 // pred_check_branch
          %520 = sbr.rel (%p518) target = $region52
        $region51: #{tpu_custom_call.1} parent=47 // pred_region
          %s521 = sand.u32 %s138, 1
          %s522 = scalar_lea.sflag [#allocation3], %s521
          %s523 = sand.u32 %s138, 1
          %s524 = smul.addr %s523, 16
          %s525 = scalar_lea.vmem [#allocation2], %s524
          %526 = dma.done %s522, 256
        $region52: #{tpu_custom_call.1} parent=47 // pred_fallthru
          _
      $region48: #{tpu_custom_call.1} parent=5 // pred_fallthru
        _
    $region6: #{tpu_custom_call.1} parent=1 // loop_footer
      %s18 = sadd.s32 1, %s14
    $region7: #{tpu_custom_call.1} parent=1 // loop_footer_branch
      %13 = sbr.rel target = $region3
    $region8: #{tpu_custom_call.1} parent=1 // loop_exit
      _
    %527 = vsyncpa [#allocation3], 1
    %s528 = scalar_lea.sflag [#allocation3], 1
    %529 = vsyncpa %s528, 1

</llo_original>
